<compile_context>
chip_gen: v5e
topology: v5e:2x2
jax: 0.10.0
libtpu: 0.0.40
codegen_flags: <defaults>
</compile_context>

<pallas_src>
import functools

import jax
import jax.numpy as jnp
from jax import lax
from jax.experimental import pallas as pl
from jax.experimental.pallas import tpu as pltpu


def _round_up(v, m):
    return (v + m - 1) // m * m


def _segment_sum_kernel(batch_ref, x_ref, out_ref, *, compute_dtype=None):
    # Grid = (node-range splits [parallel], channel blocks [parallel],
    #         node tiles [arbitrary / reduction]).
    ni = pl.program_id(2)

    b = batch_ref[...]                                   # [1, tn] int32
    x = x_ref[...]                                       # [tn, tc]
    if compute_dtype is not None:
        x = x.astype(compute_dtype)

    g = out_ref.shape[0]
    tn = x.shape[0]

    # One-hot graph membership in [g, tn] orientation so the MXU contraction
    # is the canonical [M,K]@[K,N].  Padded node rows carry an out-of-range
    # sentinel id, so their one-hot column is all zeros.
    graph_ids = lax.broadcasted_iota(jnp.int32, (g, tn), 0)
    onehot = (graph_ids == b).astype(x.dtype)            # [g, tn]

    partial = lax.dot_general(
        onehot, x,
        dimension_numbers=(((1,), (0,)), ((), ())),
        preferred_element_type=jnp.float32,
    )                                                    # [g, tc] f32

    # The f32 output block is resident across the reduction axis -> use it as
    # the accumulator directly (no zero-fill, no separate scratch).
    @pl.when(ni == 0)
    def _():
        out_ref[...] = partial

    @pl.when(ni > 0)
    def _():
        out_ref[...] += partial


def global_mean_pool(x, batch, num_graphs, *, node_tile=2048, channel_tile=512,
                     compute_dtype=None):
    """x: [N, C] float, batch: [N] int graph ids in [0, num_graphs)."""
    n, c = x.shape
    out_dtype = x.dtype

    # ---- tiling / padding choices -----------------------------------------
    # Channels: lane-dense tiles; use >=2 channel blocks when C allows so the
    # leading "parallel" axes can shard across v7x's two TensorCores.
    c_128 = _round_up(c, 128)
    tc_cap = _round_up(channel_tile, 128)
    if c_128 >= 256:
        tc = min(_round_up(c_128 // 2, 128), tc_cap)
    else:
        tc = c_128
    c_pad = _round_up(c_128, tc)
    c_blocks = c_pad // tc

    # Nodes: big tiles (multiple of 256 = MXU contraction depth on v6e/v7x),
    # capped for tiny inputs.
    tn = _round_up(min(node_tile, _round_up(n, 256)), 256)

    # If there is only one channel block, split the node range in two so a
    # second TensorCore (v7x) still has work; harmless on v5e/v6e.
    n_splits = 2 if (c_blocks == 1 and n > tn) else 1
    n_pad = _round_up(n, tn * n_splits)
    tiles_per_split = n_pad // (tn * n_splits)

    g_pad = _round_up(num_graphs, 8)

    # ---- host-side prep -----------------------------------------------------
    # x keeps its original dtype; pad only when actually misaligned.
    if n_pad != n or c_pad != c:
        x_p = jnp.pad(x, ((0, n_pad - n), (0, c_pad - c)))
    else:
        x_p = x
    batch_i32 = batch.astype(jnp.int32)
    # Lane-dense row of graph ids; padded rows get an out-of-range sentinel id
    # so they can never pollute any graph's sum.
    batch_p = jnp.pad(batch_i32, (0, n_pad - n),
                      constant_values=g_pad).reshape(1, n_pad)

    # ---- VMEM budget (double-buffered inputs + resident output block) ------
    x_item = jnp.dtype(x.dtype).itemsize
    vmem_needed = (
        2 * tn * tc * x_item          # x tile, double-buffered
        + 2 * 8 * tn * 4              # batch-id row tile (sublane-padded)
        + 2 * g_pad * tc * 4          # resident f32 output/accumulator block
    )
    vmem_limit = int(min(48 * 1024 * 1024, max(16 * 1024 * 1024, 2 * vmem_needed)))

    kernel = functools.partial(_segment_sum_kernel, compute_dtype=compute_dtype)

    sums = pl.pallas_call(
        kernel,
        out_shape=jax.ShapeDtypeStruct((n_splits, g_pad, c_pad), jnp.float32),
        grid_spec=pltpu.PrefetchScalarGridSpec(
            num_scalar_prefetch=0,
            grid=(n_splits, c_blocks, tiles_per_split),
            in_specs=[
                # batch ids: one lane-dense [1, tn] row per node tile
                pl.BlockSpec((1, tn),
                             lambda s, ci, ni: (0, s * tiles_per_split + ni)),
                # node features
                pl.BlockSpec((tn, tc),
                             lambda s, ci, ni: (s * tiles_per_split + ni, ci)),
            ],
            out_specs=pl.BlockSpec((None, g_pad, tc),
                                   lambda s, ci, ni: (s, 0, ci)),
        ),
        compiler_params=pltpu.CompilerParams(
            dimension_semantics=("parallel", "parallel", "arbitrary"),
            vmem_limit_bytes=vmem_limit,
        ),
    )(batch_p, x_p)

    # ---- tiny epilogue in plain JAX -----------------------------------------
    total = sums[0] if n_splits == 1 else sums.sum(axis=0)       # [g_pad, c_pad]
    counts = jnp.zeros((num_graphs,), jnp.float32).at[batch_i32].add(1.0)
    counts = jnp.maximum(counts, 1.0)[:, None]                   # [G, 1]
    mean = total[:num_graphs, :c] / counts
    return mean.astype(out_dtype)


if __name__ == "__main__":
    key = jax.random.PRNGKey(0)

    def reference(x, batch, g):
        onehot = (batch[:, None] == jnp.arange(g)[None, :]).astype(jnp.float32)
        s = onehot.T @ x.astype(jnp.float32)
        cnt = jnp.maximum(onehot.sum(axis=0), 1.0)[:, None]
        return (s / cnt).astype(x.dtype)

    k1, k2, k3 = jax.random.split(key, 3)

    # Case 1: tiny sorted batch (matches the module's typical PyG usage).
    N, C, G = 64, 32, 2
    x = jax.random.normal(k1, (N, C), dtype=jnp.float32)
    batch = jnp.concatenate(
        [jnp.zeros((40,), jnp.int32), jnp.ones((N - 40,), jnp.int32)])
    out = jax.block_until_ready(global_mean_pool(x, batch, G))
    assert out.shape == (G, C)
    assert out.dtype == x.dtype
    assert jnp.allclose(out, reference(x, batch, G), atol=5e-3, rtol=1e-2)

    # Case 2: multi node-tile reduction + two parallel channel blocks.
    N2, C2, G2 = 600, 192, 5
    x2 = jax.random.normal(k2, (N2, C2), dtype=jnp.float32)
    batch2 = jax.random.randint(k3, (N2,), 0, G2, dtype=jnp.int32)
    out2 = jax.block_until_ready(global_mean_pool(x2, batch2, G2, node_tile=256))
    assert jnp.allclose(out2, reference(x2, batch2, G2), atol=5e-3, rtol=1e-2)

    # Case 3: small C -> node-range split path (keeps a 2nd TensorCore busy).
    x3 = x2[:, :64]
    out3 = jax.block_until_ready(global_mean_pool(x3, batch2, G2, node_tile=256))
    assert jnp.allclose(out3, reference(x3, batch2, G2), atol=5e-3, rtol=1e-2)

    print("KERNEL_OK")
</pallas_src>

<mosaic_0001>
module attributes {stable_mosaic.version = 11 : i64} {
  func.func @_segment_sum_kernel(%arg0: i32, %arg1: i32, %arg2: i32, %arg3: memref<1x256xi32, #tpu.memory_space<vmem>>, %arg4: memref<256x128xf32, #tpu.memory_space<vmem>>, %arg5: memref<1x8x128xf32, #tpu.memory_space<vmem>>) attributes {dimension_semantics = [#tpu.dimension_semantics<parallel>, #tpu.dimension_semantics<parallel>, #tpu.dimension_semantics<arbitrary>], iteration_bounds = array<i64: 1, 1, 1>, scalar_prefetch = 0 : i64, scratch_operands = 0 : i64, tpu.core_type = #tpu.core_type<tc>, window_params = [{transform_indices = @transform_0, window_bounds = array<i64: 1, 256>}, {transform_indices = @transform_1, window_bounds = array<i64: 256, 128>}, {transform_indices = @transform_2, window_bounds = array<i64: 1, 8, 128>}]} {
    %c0 = arith.constant 0 : index
    %c0_0 = arith.constant 0 : index
    %0 = vector.load %arg3[%c0, %c0_0] : memref<1x256xi32, #tpu.memory_space<vmem>>, vector<1x256xi32>
    %c0_1 = arith.constant 0 : index
    %c0_2 = arith.constant 0 : index
    %1 = vector.load %arg4[%c0_1, %c0_2] : memref<256x128xf32, #tpu.memory_space<vmem>>, vector<256x128xf32>
    %2 = tpu.iota {dimensions = array<i32: 0>} : vector<8x256xi32>
    %3 = vector.broadcast %0 : vector<1x256xi32> to vector<8x256xi32>
    %4 = arith.cmpi eq, %2, %3 : vector<8x256xi32>
    %5 = arith.extui %4 : vector<8x256xi1> to vector<8x256xi32>
    %6 = arith.sitofp %5 : vector<8x256xi32> to vector<8x256xf32>
    %cst = arith.constant dense<0.000000e+00> : vector<8x128xf32>
    %7 = tpu.matmul %6, %1, %cst {dimension_numbers = #tpu.dot_dimension_numbers<[1], [0], [0], [1], [0, 0, 1, 1], [], []>} : vector<8x256xf32>, vector<256x128xf32>, vector<8x128xf32> -> vector<8x128xf32>
    %c0_i32 = arith.constant 0 : i32
    %8 = arith.cmpi eq, %arg2, %c0_i32 : i32
    %9 = arith.extui %8 : i1 to i32
    %c0_i32_3 = arith.constant 0 : i32
    %10 = arith.cmpi ne, %9, %c0_i32_3 : i32
    scf.if %10 {
      %c0_6 = arith.constant 0 : index
      %c0_7 = arith.constant 0 : index
      %c0_8 = arith.constant 0 : index
      %14 = vector.load %arg5[%c0_6, %c0_7, %c0_8] : memref<1x8x128xf32, #tpu.memory_space<vmem>>, vector<1x8x128xf32>
      %15 = vector.shape_cast %14 : vector<1x8x128xf32> to vector<8x128xf32>
      %16 = vector.shape_cast %7 : vector<8x128xf32> to vector<1x8x128xf32>
      tpu.vector_store %arg5[%c0_6, %c0_7, %c0_8], %16 {strides = array<i32>} : memref<1x8x128xf32, #tpu.memory_space<vmem>>, vector<1x8x128xf32>,
    } else {
    }
    %c0_i32_4 = arith.constant 0 : i32
    %11 = arith.cmpi sgt, %arg2, %c0_i32_4 : i32
    %12 = arith.extui %11 : i1 to i32
    %c0_i32_5 = arith.constant 0 : i32
    %13 = arith.cmpi ne, %12, %c0_i32_5 : i32
    scf.if %13 {
      %c0_6 = arith.constant 0 : index
      %c0_7 = arith.constant 0 : index
      %c0_8 = arith.constant 0 : index
      %14 = vector.load %arg5[%c0_6, %c0_7, %c0_8] : memref<1x8x128xf32, #tpu.memory_space<vmem>>, vector<1x8x128xf32>
      %15 = vector.shape_cast %14 : vector<1x8x128xf32> to vector<8x128xf32>
      %16 = arith.addf %15, %7 : vector<8x128xf32>
      %c0_9 = arith.constant 0 : index
      %c0_10 = arith.constant 0 : index
      %c0_11 = arith.constant 0 : index
      %17 = vector.load %arg5[%c0_9, %c0_10, %c0_11] : memref<1x8x128xf32, #tpu.memory_space<vmem>>, vector<1x8x128xf32>
      %18 = vector.shape_cast %17 : vector<1x8x128xf32> to vector<8x128xf32>
      %19 = vector.shape_cast %16 : vector<8x128xf32> to vector<1x8x128xf32>
      tpu.vector_store %arg5[%c0_9, %c0_10, %c0_11], %19 {strides = array<i32>} : memref<1x8x128xf32, #tpu.memory_space<vmem>>, vector<1x8x128xf32>,
    } else {
    }
    return
  }
  func.func @transform_0(%arg0: i32, %arg1: i32, %arg2: i32) -> (i32, i32) {
    %c1_i32 = arith.constant 1 : i32
    %0 = arith.muli %arg0, %c1_i32 : i32
    %1 = arith.addi %0, %arg2 : i32
    %c0_i32 = arith.constant 0 : i32
    %c0_i32_0 = arith.constant 0 : i32
    return %c0_i32, %1 : i32, i32
  }
  func.func @transform_1(%arg0: i32, %arg1: i32, %arg2: i32) -> (i32, i32) {
    %c1_i32 = arith.constant 1 : i32
    %0 = arith.muli %arg0, %c1_i32 : i32
    %1 = arith.addi %0, %arg2 : i32
    %c0_i32 = arith.constant 0 : i32
    return %1, %arg1 : i32, i32
  }
  func.func @transform_2(%arg0: i32, %arg1: i32, %arg2: i32) -> (i32, i32, i32) {
    %c0_i32 = arith.constant 0 : i32
    %c0_i32_0 = arith.constant 0 : i32
    return %arg0, %c0_i32, %arg1 : i32, i32, i32
  }
}

</mosaic_0001>

<llo_original>
// kernel: tpu_custom_call.1
$region0: #{tpu_custom_call.1}
  #allocation0 [shape = 'u32[]', space=smem, size = 0x4, offset = 0x4, fixed_abs, tag = 'smem constant byte address 0x4 - core index']
  #allocation1 [shape = 'u32[72,128]{1,0:T(1,128)}', space=vmem, size = 0x9000, scoped, tag = 'internal scratch']
  %s0 = inlined_call_operand.hbm [shape: s32[1,256], index: 0, kind: input, shape index: {}]
  %s1 = inlined_call_operand.hbm [shape: f32[256,128], index: 1, kind: input, shape index: {}]
  %s2 = inlined_call_operand.hbm [shape: f32[1,8,128], index: 2, kind: output, shape index: {}]
  %s3 = sld [smem:[#allocation0]]
  $region34: #{tpu_custom_call.1} parent=0
    _
  %s5 = ssub.s32 1, %s3
  %s6 = scalar_select 0, %s5, %s3
  $region1: #{tpu_custom_call.1} parent=0
    #allocation2 [shape = 'u8[1024]{0}', space=vmem, size = 0x400, scoped, tag = 'input window, operand 0, single buffered']
    #allocation3 [shape = 's32[1]{0}', space=sflag, size = 0x4, scoped, tag = 'scoped memory for tpu_custom_call.1']
    #allocation4 [shape = 's32[1]{0}', space=sflag, size = 0x4, scoped, tag = 'scoped memory for tpu_custom_call.1']
    #allocation5 [shape = 'u8[131072]{0}', space=vmem, size = 0x20000, scoped, tag = 'input window, operand 1, single buffered']
    #allocation6 [shape = 's32[1]{0}', space=sflag, size = 0x4, scoped, tag = 'scoped memory for tpu_custom_call.1']
    #allocation7 [shape = 'u8[4096]{0}', space=vmem, size = 0x1000, scoped, tag = 'output window, operand 0, single buffered']
    %7 = vsyncpa [#allocation3], 0
    %8 = vsyncpa [#allocation6], 0
    %9 = vsyncpa [#allocation4], 0
    // Predicated region
    $region2: #{tpu_custom_call.1} parent=1 // pred_check
      _
    $region3: #{tpu_custom_call.1} parent=1 // pred_check_branch
      %11 = sbr.rel (0) target = $region5
    $region4: #{tpu_custom_call.1} parent=1 // pred_region
      %s12 = sadd.s32 0, 0
      %s13 = smul.u32 2, %s12
      %15 = vsyncadd [#allocation3], 0
      %s16 = scalar_lea.hbm %s0, %s13
      %s18 = sshll.u32 %s16, 4
      %s19 = int_to_ptr.hbm [resolvable:$true] %s18
      %s20 = sshll.u32 [#allocation2], 4
      %s21 = int_to_ptr.vmem [resolvable:$true] %s20
      %23 = dma.hbm_to_vmem [thread:$0]  %s19, 32, %s21, [#allocation3]
    $region5: #{tpu_custom_call.1} parent=1 // pred_fallthru
      _
    // Predicated region
    $region6: #{tpu_custom_call.1} parent=1 // pred_check
      _
    $region7: #{tpu_custom_call.1} parent=1 // pred_check_branch
      %25 = sbr.rel (0) target = $region9
    $region8: #{tpu_custom_call.1} parent=1 // pred_region
      %s26 = sadd.s32 0, 0
      %s27 = smul.u32 32, %s26
      %29 = vsyncadd [#allocation6], 0
      %s30 = smul.addr %s27, 8
      %s31 = scalar_lea.hbm %s1, %s30
      %s32 = sshll.u32 %s31, 4
      %s33 = int_to_ptr.hbm [resolvable:$true] %s32
      %s34 = sshll.u32 [#allocation5], 4
      %s35 = int_to_ptr.vmem [resolvable:$true] %s34
      %40 = dma.hbm_to_vmem [thread:$0]  %s33, 4096, %s35, [#allocation6], 128, 128, 8
    $region9: #{tpu_custom_call.1} parent=1 // pred_fallthru
      _
    // Predicated region
    $region10: #{tpu_custom_call.1} parent=1 // pred_check
      _
    $region11: #{tpu_custom_call.1} parent=1 // pred_check_branch
      %42 = sbr.rel (0) target = $region13
    $region12: #{tpu_custom_call.1} parent=1 // pred_region
      %44 = dma.done [#allocation3], 32
    $region13: #{tpu_custom_call.1} parent=1 // pred_fallthru
      _
    // Predicated region
    $region14: #{tpu_custom_call.1} parent=1 // pred_check
      _
    $region15: #{tpu_custom_call.1} parent=1 // pred_check_branch
      %46 = sbr.rel (0) target = $region17
    $region16: #{tpu_custom_call.1} parent=1 // pred_region
      %48 = dma.done [#allocation6], 4096
    $region17: #{tpu_custom_call.1} parent=1 // pred_fallthru
      _
    %s49 = sadd.s32 0, 0
    %s50 = smul.u32 2, %s49
    %s51 = sadd.s32 0, 0
    %s52 = smul.u32 32, %s51
    %v53 = vld [vmem:[#allocation2] sm:$0x3]
    %v54 = vld [vmem:[#allocation5] sm:$0xff]
    %v55 = vld [vmem:[#allocation5 + $0x8] sm:$0xff]
    %v56 = vld [vmem:[#allocation5 + $0x10] sm:$0xff]
    %v57 = vld [vmem:[#allocation5 + $0x18] sm:$0xff]
    %v58 = vld [vmem:[#allocation5 + $0x20] sm:$0xff]
    %v59 = vld [vmem:[#allocation5 + $0x28] sm:$0xff]
    %v60 = vld [vmem:[#allocation5 + $0x30] sm:$0xff]
    %v61 = vld [vmem:[#allocation5 + $0x38] sm:$0xff]
    %v62 = vld [vmem:[#allocation5 + $0x40] sm:$0xff]
    %v63 = vld [vmem:[#allocation5 + $0x48] sm:$0xff]
    %v64 = vld [vmem:[#allocation5 + $0x50] sm:$0xff]
    %v65 = vld [vmem:[#allocation5 + $0x58] sm:$0xff]
    %v66 = vld [vmem:[#allocation5 + $0x60] sm:$0xff]
    %v67 = vld [vmem:[#allocation5 + $0x68] sm:$0xff]
    %v68 = vld [vmem:[#allocation5 + $0x70] sm:$0xff]
    %v69 = vld [vmem:[#allocation5 + $0x78] sm:$0xff]
    %v70 = vld [vmem:[#allocation5 + $0x80] sm:$0xff]
    %v71 = vld [vmem:[#allocation5 + $0x88] sm:$0xff]
    %v72 = vld [vmem:[#allocation5 + $0x90] sm:$0xff]
    %v73 = vld [vmem:[#allocation5 + $0x98] sm:$0xff]
    %v74 = vld [vmem:[#allocation5 + $0xa0] sm:$0xff]
    %v75 = vld [vmem:[#allocation5 + $0xa8] sm:$0xff]
    %v76 = vld [vmem:[#allocation5 + $0xb0] sm:$0xff]
    %v77 = vld [vmem:[#allocation5 + $0xb8] sm:$0xff]
    %v78 = vld [vmem:[#allocation5 + $0xc0] sm:$0xff]
    %v79 = vld [vmem:[#allocation5 + $0xc8] sm:$0xff]
    %v80 = vld [vmem:[#allocation5 + $0xd0] sm:$0xff]
    %v81 = vld [vmem:[#allocation5 + $0xd8] sm:$0xff]
    %v82 = vld [vmem:[#allocation5 + $0xe0] sm:$0xff]
    %v83 = vld [vmem:[#allocation5 + $0xe8] sm:$0xff]
    %v84 = vld [vmem:[#allocation5 + $0xf0] sm:$0xff]
    %v85 = vld [vmem:[#allocation5 + $0xf8] sm:$0xff]
    %v86 = vlaneseq
    %v87 = vshrl.u32 %v86, 7
    %v88 = vperm.slane %v53, 0
    %v89 = vperm.slane %v53, 1
    %vm90 = vcmp.eq.s32.totalorder %v87, %v88
    %vm91 = vcmp.eq.s32.totalorder %v87, %v89
    %v92 = vsel %vm90, 1, 0
    %v93 = vsel %vm91, 1, 0
    %v94 = vcvt.s32.f32 %v92
    %v95 = vcvt.s32.f32 %v93
    %96 = vmatpush.msra.mxu0 %v69
    %97 = vmatpush.msra.mxu0 %v68
    %98 = vmatpush.msra.mxu0 %v67
    %99 = vmatpush.msra.mxu0 %v66
    %100 = vmatpush.msra.mxu0 %v65
    %101 = vmatpush.msra.mxu0 %v64
    %102 = vmatpush.msra.mxu0 %v63
    %103 = vmatpush.msra.mxu0 %v62
    %104 = vmatpush.msra.mxu0 %v61
    %105 = vmatpush.msra.mxu0 %v60
    %106 = vmatpush.msra.mxu0 %v59
    %107 = vmatpush.msra.mxu0 %v58
    %108 = vmatpush.msra.mxu0 %v57
    %109 = vmatpush.msra.mxu0 %v56
    %110 = vmatpush.msra.mxu0 %v55
    %111 = vmatpush.msra.mxu0 %v54
    %112 = vmatmul.f32.gmra.mxu0 %v94
    %v113 = vpop.f32.mrf.mxu0
    %v114 = vadd.f32 0.0, %v113
    %115 = vdwg.mxu0
    %116 = vmatpush.msra.mxu0 %v85
    %117 = vmatpush.msra.mxu0 %v84
    %118 = vmatpush.msra.mxu0 %v83
    %119 = vmatpush.msra.mxu0 %v82
    %120 = vmatpush.msra.mxu0 %v81
    %121 = vmatpush.msra.mxu0 %v80
    %122 = vmatpush.msra.mxu0 %v79
    %123 = vmatpush.msra.mxu0 %v78
    %124 = vmatpush.msra.mxu0 %v77
    %125 = vmatpush.msra.mxu0 %v76
    %126 = vmatpush.msra.mxu0 %v75
    %127 = vmatpush.msra.mxu0 %v74
    %128 = vmatpush.msra.mxu0 %v73
    %129 = vmatpush.msra.mxu0 %v72
    %130 = vmatpush.msra.mxu0 %v71
    %131 = vmatpush.msra.mxu0 %v70
    %132 = vmatmul.f32.gmra.mxu0 %v95
    %v133 = vpop.f32.mrf.mxu0
    %v134 = vadd.f32 %v114, %v133
    %135 = vdwg.mxu0
    %p136 = scmp.eq.s32.totalorder 0, 0
    // Predicated region
    $region18: #{tpu_custom_call.1} parent=1 // pred_check
      %p137 = pneg %p136
    $region19: #{tpu_custom_call.1} parent=1 // pred_check_branch
      %139 = sbr.rel (%p137) target = $region21
    $region20: #{tpu_custom_call.1} parent=1 // pred_region
      %140 = vst [vmem:[#allocation7] sm:$0xff] %v134
    $region21: #{tpu_custom_call.1} parent=1 // pred_fallthru
      _
    %p141 = scmp.gt.s32.totalorder 0, 0
    // Predicated region
    $region22: #{tpu_custom_call.1} parent=1 // pred_check
      %p142 = pneg %p141
    $region23: #{tpu_custom_call.1} parent=1 // pred_check_branch
      %144 = sbr.rel (%p142) target = $region25
    $region24: #{tpu_custom_call.1} parent=1 // pred_region
      %v145 = vld [vmem:[#allocation7] sm:$0xff]
      %v146 = vadd.f32 %v145, %v134
      %147 = vst [vmem:[#allocation7] sm:$0xff] %v146
    $region25: #{tpu_custom_call.1} parent=1 // pred_fallthru
      _
    // Predicated region
    $region26: #{tpu_custom_call.1} parent=1 // pred_check
      _
    $region27: #{tpu_custom_call.1} parent=1 // pred_check_branch
      %149 = sbr.rel (0) target = $region29
    $region28: #{tpu_custom_call.1} parent=1 // pred_region
      %151 = vsyncadd [#allocation4], 0
      %s153 = sshll.u32 [#allocation7], 4
      %s154 = int_to_ptr.vmem [resolvable:$true] %s153
      %s155 = sshll.u32 %s2, 4
      %s156 = int_to_ptr.hbm [resolvable:$true] %s155
      %158 = dma.vmem_to_hbm [thread:$0]  %s154, 128, %s156, [#allocation4]
    $region29: #{tpu_custom_call.1} parent=1 // pred_fallthru
      _
    // Predicated region
    $region30: #{tpu_custom_call.1} parent=1 // pred_check
      _
    $region31: #{tpu_custom_call.1} parent=1 // pred_check_branch
      %160 = sbr.rel (0) target = $region33
    $region32: #{tpu_custom_call.1} parent=1 // pred_region
      %162 = dma.done [#allocation4], 128
    $region33: #{tpu_custom_call.1} parent=1 // pred_fallthru
      _
    %163 = vsyncpa [#allocation3], 1
    %164 = vsyncpa [#allocation6], 1
    %165 = vsyncpa [#allocation4], 1

</llo_original>
